<compile_context>
chip_gen: v7x
topology: tpu7x:2x2x1
jax: 0.10.0
libtpu: 0.0.40
codegen_flags: <defaults>
</compile_context>

<pallas_src>
import math

import jax
import jax.numpy as jnp
import numpy as np
from jax import lax
from jax.experimental import pallas as pl
from jax.experimental.pallas import tpu as pltpu

EPS = 1e-12                        # torch F.normalize default eps
CLAMP_MAX = math.log(1.0 / 0.01)   # = log(100), self.clamp_max


def _round_up(x, m):
    return (x + m - 1) // m * m


def cosine_gate_kernel(x_ref, w_ref, b_ref, sim_ref, out_ref):
    # x_ref   : VMEM (TILE_N, D)   -- token tile (x.dtype)
    # w_ref   : VMEM (D, P)        -- projector weight, pre-transposed (x.dtype)
    # b_ref   : VMEM (1, P) f32    -- projector bias
    # sim_ref : VMEM (P, E) f32    -- column-normalized sim_matrix * logit_scale
    # out_ref : VMEM (TILE_N, E)   -- logits tile (f32)

    # cosine_projector(x): contraction over model_dim; weight was transposed
    # once in the wrapper so the MXU consumes it directly (no XLU transpose).
    # bf16 inputs stay bf16 on the MXU with f32 accumulation.
    proj = jnp.dot(x_ref[...], w_ref[...], preferred_element_type=jnp.float32)
    proj = proj + b_ref[...]

    # F.normalize(proj, dim=1): rsqrt runs on the otherwise-idle EUP slot.
    # rsqrt(max(ss, eps^2)) == 1 / max(||row||, eps)   (all quantities >= 0).
    ss = jnp.sum(proj * proj, axis=-1, keepdims=True)
    inv = lax.rsqrt(jnp.maximum(ss, jnp.float32(EPS * EPS)))
    proj_n = proj * inv

    # proj_n @ (sim_n * logit_scale): scale was folded into the resident
    # parameter in the wrapper, so this is the final result.
    logits = jnp.dot(proj_n, sim_ref[...], preferred_element_type=jnp.float32)
    out_ref[...] = logits.astype(out_ref.dtype)


def cosine_topk_gate(x, weight, bias, sim_matrix, temperature, *, tile_n=4096):
    """x: (N, model_dim). weight: (proj_dim, model_dim) (torch Linear layout).
    Returns logits (N, num_experts) float32."""
    n, d = x.shape
    p, _ = weight.shape
    e = sim_matrix.shape[1]

    # ---- Parameter-only (loop-invariant) preprocessing, hoisted out of the
    # per-token-tile kernel body.  If this gate is called repeatedly with
    # fixed parameters, precompute (w_t, b2d, sim_s) once outside this
    # wrapper and pass them in instead of re-emitting these XLA ops per call.
    w_t = jnp.transpose(weight).astype(x.dtype)                   # (D, P)
    b2d = bias.reshape(1, p).astype(jnp.float32)                  # (1, P)
    sim_f32 = sim_matrix.astype(jnp.float32)
    col_norm = jnp.sqrt(jnp.sum(sim_f32 * sim_f32, axis=0, keepdims=True))
    sim_n = sim_f32 / jnp.maximum(col_norm, EPS)                  # F.normalize(dim=0)
    # logit_scale = clamp(temperature, max=log(100)).exp(), folded into sim_n.
    scale = jnp.exp(jnp.minimum(
        temperature.reshape(()).astype(jnp.float32), jnp.float32(CLAMP_MAX)))
    sim_s = sim_n * scale                                         # (P, E)

    # ---- Token-axis tiling: biggest tile that (a) fits a conservative VMEM
    # budget (double-buffered x + out tiles) and (b) still yields >= 2 grid
    # steps so v7x's second TensorCore gets work.  No jnp.pad of x: Pallas
    # masks the ragged last tile on store.
    bytes_per_row = d * x.dtype.itemsize + e * 4
    vmem_budget = 16 * 1024 * 1024          # per-buffer; ~2x with double-buffering
    max_rows = max(8, (vmem_budget // (2 * bytes_per_row)) // 8 * 8)
    tile_n = max(8, min(tile_n, max_rows, _round_up(pl.cdiv(n, 2), 8)))
    grid = (pl.cdiv(n, tile_n),)

    # NOTE: w_t / b2d / sim_s are resident (constant index_map); at these
    # parameter sizes the default double-buffering of them is negligible.
    out = pl.pallas_call(
        cosine_gate_kernel,
        out_shape=jax.ShapeDtypeStruct((n, e), jnp.float32),
        grid=grid,
        in_specs=[
            pl.BlockSpec((tile_n, d), lambda i: (i, 0)),   # x tile
            pl.BlockSpec((d, p), lambda i: (0, 0)),        # weight^T (resident)
            pl.BlockSpec((1, p), lambda i: (0, 0)),        # bias (resident)
            pl.BlockSpec((p, e), lambda i: (0, 0)),        # scaled sim_n (resident)
        ],
        out_specs=pl.BlockSpec((tile_n, e), lambda i: (i, 0)),  # unpadded store
        compiler_params=pltpu.CompilerParams(
            dimension_semantics=("parallel",)),   # megacore sharding on v7x
    )(x, w_t, b2d, sim_s)

    return out


def reference(x, weight, bias, sim_matrix, temperature):
    proj = x @ weight.T + bias
    proj_n = proj / jnp.maximum(
        jnp.linalg.norm(proj, axis=1, keepdims=True), EPS)
    sim_n = sim_matrix / jnp.maximum(
        jnp.linalg.norm(sim_matrix, axis=0, keepdims=True), EPS)
    logits = proj_n @ sim_n
    scale = jnp.exp(jnp.minimum(temperature, jnp.float32(CLAMP_MAX)))
    return logits * scale


if __name__ == "__main__":
    # Module hyperparameters (small, consistent with the forward):
    model_dim = 32
    proj_dim = min(model_dim // 2, 256)        # 16
    num_global_experts = 8
    init_t = 0.5
    batch, height, width = 2, 16, 16
    n_tokens = batch * height * width          # 512 tokens -> 2 grid tiles

    key = jax.random.PRNGKey(0)
    kx, kw, kb, ks = jax.random.split(key, 4)

    x = jax.random.normal(kx, (n_tokens, model_dim), dtype=jnp.float32)
    # Linear(model_dim, proj_dim): weight (proj_dim, model_dim), bias (proj_dim,)
    bound = 1.0 / np.sqrt(model_dim)
    weight = jax.random.uniform(kw, (proj_dim, model_dim),
                                minval=-bound, maxval=bound, dtype=jnp.float32)
    bias = jax.random.uniform(kb, (proj_dim,), minval=-bound, maxval=bound,
                              dtype=jnp.float32)
    # sim_matrix ~ Normal(0, 0.01), shape (proj_dim, num_global_experts)
    sim_matrix = 0.01 * jax.random.normal(
        ks, (proj_dim, num_global_experts), dtype=jnp.float32)
    # temperature = log(1 / init_t)
    temperature = jnp.array([np.log(1.0 / init_t)], dtype=jnp.float32)

    out = jax.block_until_ready(
        cosine_topk_gate(x, weight, bias, sim_matrix, temperature))

    ref = reference(x, weight, bias, sim_matrix, temperature)
    np.testing.assert_allclose(np.asarray(out), np.asarray(ref),
                               rtol=2e-5, atol=2e-5)
    print("KERNEL_OK")
</pallas_src>

<mosaic_0001>
module attributes {stable_mosaic.version = 11 : i64} {
  func.func @cosine_gate_kernel(%arg0: i32, %arg1: memref<256x32xf32, #tpu.memory_space<vmem>>, %arg2: memref<32x16xf32, #tpu.memory_space<vmem>>, %arg3: memref<1x16xf32, #tpu.memory_space<vmem>>, %arg4: memref<16x8xf32, #tpu.memory_space<vmem>>, %arg5: memref<256x8xf32, #tpu.memory_space<vmem>>) attributes {dimension_semantics = [#tpu.dimension_semantics<parallel>], iteration_bounds = array<i64: 2>, scalar_prefetch = 0 : i64, scratch_operands = 0 : i64, tpu.core_type = #tpu.core_type<tc>, window_params = [{transform_indices = @transform_0, window_bounds = array<i64: 256, 32>}, {pipeline_mode = #tpu.pipeline_mode<synchronous>, transform_indices = @transform_1, window_bounds = array<i64: 32, 16>}, {pipeline_mode = #tpu.pipeline_mode<synchronous>, transform_indices = @transform_2, window_bounds = array<i64: 1, 16>}, {pipeline_mode = #tpu.pipeline_mode<synchronous>, transform_indices = @transform_3, window_bounds = array<i64: 16, 8>}, {transform_indices = @transform_4, window_bounds = array<i64: 256, 8>}]} {
    %c0 = arith.constant 0 : index
    %c0_0 = arith.constant 0 : index
    %0 = vector.load %arg1[%c0, %c0_0] : memref<256x32xf32, #tpu.memory_space<vmem>>, vector<256x32xf32>
    %c0_1 = arith.constant 0 : index
    %c0_2 = arith.constant 0 : index
    %1 = vector.load %arg2[%c0_1, %c0_2] : memref<32x16xf32, #tpu.memory_space<vmem>>, vector<32x16xf32>
    %cst = arith.constant dense<0.000000e+00> : vector<256x16xf32>
    %2 = tpu.matmul %0, %1, %cst {dimension_numbers = #tpu.dot_dimension_numbers<[1], [0], [0], [1], [0, 0, 1, 1], [], []>} : vector<256x32xf32>, vector<32x16xf32>, vector<256x16xf32> -> vector<256x16xf32>
    %c0_3 = arith.constant 0 : index
    %c0_4 = arith.constant 0 : index
    %3 = vector.load %arg3[%c0_3, %c0_4] : memref<1x16xf32, #tpu.memory_space<vmem>>, vector<1x16xf32>
    %4 = vector.broadcast %3 : vector<1x16xf32> to vector<256x16xf32>
    %5 = arith.addf %2, %4 : vector<256x16xf32>
    %6 = arith.mulf %5, %5 : vector<256x16xf32>
    %cst_5 = arith.constant dense<0.000000e+00> : vector<256xf32>
    %7 = vector.multi_reduction <add>, %6, %cst_5 [1] : vector<256x16xf32> to vector<256xf32>
    %8 = vector.shape_cast %7 : vector<256xf32> to vector<256x1xf32>
    %cst_6 = arith.constant 1.000000e-24 : f32
    %9 = vector.broadcast %cst_6 : f32 to vector<256x1xf32>
    %10 = arith.maximumf %8, %9 : vector<256x1xf32>
    %11 = math.rsqrt %10 : vector<256x1xf32>
    %12 = vector.broadcast %11 : vector<256x1xf32> to vector<256x16xf32>
    %13 = arith.mulf %5, %12 : vector<256x16xf32>
    %c0_7 = arith.constant 0 : index
    %c0_8 = arith.constant 0 : index
    %14 = vector.load %arg4[%c0_7, %c0_8] : memref<16x8xf32, #tpu.memory_space<vmem>>, vector<16x8xf32>
    %cst_9 = arith.constant dense<0.000000e+00> : vector<256x8xf32>
    %15 = tpu.matmul %13, %14, %cst_9 {dimension_numbers = #tpu.dot_dimension_numbers<[1], [0], [0], [1], [0, 0, 1, 1], [], []>} : vector<256x16xf32>, vector<16x8xf32>, vector<256x8xf32> -> vector<256x8xf32>
    %c0_10 = arith.constant 0 : index
    %c0_11 = arith.constant 0 : index
    %16 = vector.load %arg5[%c0_10, %c0_11] : memref<256x8xf32, #tpu.memory_space<vmem>>, vector<256x8xf32>
    tpu.vector_store %arg5[%c0_10, %c0_11], %15 {strides = array<i32>} : memref<256x8xf32, #tpu.memory_space<vmem>>, vector<256x8xf32>,
    return
  }
  func.func @transform_0(%arg0: i32) -> (i32, i32) {
    %c0_i32 = arith.constant 0 : i32
    %c0_i32_0 = arith.constant 0 : i32
    return %arg0, %c0_i32 : i32, i32
  }
  func.func @transform_1(%arg0: i32) -> (i32, i32) {
    %c0_i32 = arith.constant 0 : i32
    %c0_i32_0 = arith.constant 0 : i32
    %c0_i32_1 = arith.constant 0 : i32
    return %c0_i32, %c0_i32_0 : i32, i32
  }
  func.func @transform_2(%arg0: i32) -> (i32, i32) {
    %c0_i32 = arith.constant 0 : i32
    %c0_i32_0 = arith.constant 0 : i32
    %c0_i32_1 = arith.constant 0 : i32
    return %c0_i32, %c0_i32_0 : i32, i32
  }
  func.func @transform_3(%arg0: i32) -> (i32, i32) {
    %c0_i32 = arith.constant 0 : i32
    %c0_i32_0 = arith.constant 0 : i32
    %c0_i32_1 = arith.constant 0 : i32
    return %c0_i32, %c0_i32_0 : i32, i32
  }
  func.func @transform_4(%arg0: i32) -> (i32, i32) {
    %c0_i32 = arith.constant 0 : i32
    %c0_i32_0 = arith.constant 0 : i32
    return %arg0, %c0_i32 : i32, i32
  }
}

</mosaic_0001>

<llo_original>
// kernel: tpu_custom_call.1
$region0: #{tpu_custom_call.1}
  #allocation0 [shape = 'u32[]', space=smem, size = 0x4, offset = 0x4, fixed_abs, tag = 'smem constant byte address 0x4 - core index']
  #allocation1 [shape = 'u32[144,128]{1,0:T(1,128)}', space=vmem, size = 0x12000, scoped, tag = 'internal scratch']
  %s0 = inlined_call_operand.vmem [shape: f32[512,32], index: 0, kind: input, shape index: {}]
  %s1 = inlined_call_operand.vmem [shape: f32[32,16], index: 1, kind: input, shape index: {}]
  %s2 = inlined_call_operand.vmem [shape: f32[1,16], index: 2, kind: input, shape index: {}]
  %s3 = inlined_call_operand.vmem [shape: f32[16,8], index: 3, kind: input, shape index: {}]
  %s4 = inlined_call_operand.vmem [shape: f32[512,8], index: 4, kind: output, shape index: {}]
  %s5 = sld [smem:[#allocation0]]
  $region49: #{tpu_custom_call.1} parent=0
    _
  %s7 = ssub.s32 1, %s5
  %s8 = scalar_select 0, %s7, %s5
  loop: start=0, step=1, limit=4
  $region2: #{tpu_custom_call.1} parent=0 // loop_pre_header
    _
  $region3: #{tpu_custom_call.1} parent=0 // loop_header
    %s10 = sphi 0, %s14
    %p11 = scmp.ge.s32.totalorder %s10, 4
    %s20 = sphi 0, %s22
    %s23 = sphi 0, %s20
    %s24 = sphi 0, %s23
    %s40 = sphi 0, %s24
    %s44 = sphi 0, %s44
    %s46 = sphi 0, %s44
    %s47 = sphi 0, %s46
    %s61 = sphi 0, %s47
    %s65 = sphi 0, %s65
    %s67 = sphi 0, %s65
    %s68 = sphi 0, %s67
    %s82 = sphi 0, %s68
    %s86 = sphi 0, %s86
    %s88 = sphi 0, %s86
    %s89 = sphi 0, %s88
    %s103 = sphi 0, %s89
    %s109 = sphi 0, %s111
    %s112 = sphi 0, %s109
    %s113 = sphi 0, %s112
    %s129 = sphi 0, %s113
  $region4: #{tpu_custom_call.1} parent=0 // loop_header_branch
    %13 = sbr.rel (%p11) target = $region8
  $region5: #{tpu_custom_call.1} parent=0 // loop_body
    %s15 = ssub.s32 %s10, 1
    %s16 = ssub.s32 %s10, 2
    %s17 = sadd.s32 %s10, 1
    %s18 = ssub.s32 %s10, %s17
    %p19 = scmp.eq.s32.totalorder %s18, 0
    %s21 = sadd.s32 %s20, 1
    %s22 = scalar_select %p19, %s20, %s21
    %p25 = pneg %p19
    %p26 = scmp.eq.s32.totalorder %s10, 1
    %p27 = por %p25, %p26
    %p28 = scmp.ne.s32.totalorder %s20, %s23
    %p29 = scmp.eq.s32.totalorder %s10, 0
    %p30 = por %p28, %p29
    %p31 = scmp.ne.s32.totalorder %s20, %s23
    %p32 = scmp.eq.s32.totalorder %s15, 1
    %p33 = por %p31, %p32
    %p34 = scmp.ne.s32.totalorder %s23, %s24
    %p35 = scmp.eq.s32.totalorder %s15, 0
    %p36 = por %p34, %p35
    %p37 = scmp.ne.s32.totalorder %s23, %s24
    %p38 = scmp.eq.s32.totalorder %s16, 1
    %p39 = por %p37, %p38
    %p41 = scmp.ne.s32.totalorder %s24, %s40
    %p42 = scmp.eq.s32.totalorder %s16, 0
    %p43 = por %p41, %p42
    %s45 = sadd.s32 %s44, 1
    %p48 = scmp.eq.s32.totalorder %s10, 1
    %p49 = scmp.ne.s32.totalorder %s44, %s46
    %p50 = scmp.eq.s32.totalorder %s10, 0
    %p51 = por %p49, %p50
    %p52 = scmp.ne.s32.totalorder %s44, %s46
    %p53 = scmp.eq.s32.totalorder %s15, 1
    %p54 = por %p52, %p53
    %p55 = scmp.ne.s32.totalorder %s46, %s47
    %p56 = scmp.eq.s32.totalorder %s15, 0
    %p57 = por %p55, %p56
    %p58 = scmp.ne.s32.totalorder %s46, %s47
    %p59 = scmp.eq.s32.totalorder %s16, 1
    %p60 = por %p58, %p59
    %p62 = scmp.ne.s32.totalorder %s47, %s61
    %p63 = scmp.eq.s32.totalorder %s16, 0
    %p64 = por %p62, %p63
    %s66 = sadd.s32 %s65, 1
    %p69 = scmp.eq.s32.totalorder %s10, 1
    %p70 = scmp.ne.s32.totalorder %s65, %s67
    %p71 = scmp.eq.s32.totalorder %s10, 0
    %p72 = por %p70, %p71
    %p73 = scmp.ne.s32.totalorder %s65, %s67
    %p74 = scmp.eq.s32.totalorder %s15, 1
    %p75 = por %p73, %p74
    %p76 = scmp.ne.s32.totalorder %s67, %s68
    %p77 = scmp.eq.s32.totalorder %s15, 0
    %p78 = por %p76, %p77
    %p79 = scmp.ne.s32.totalorder %s67, %s68
    %p80 = scmp.eq.s32.totalorder %s16, 1
    %p81 = por %p79, %p80
    %p83 = scmp.ne.s32.totalorder %s68, %s82
    %p84 = scmp.eq.s32.totalorder %s16, 0
    %p85 = por %p83, %p84
    %s87 = sadd.s32 %s86, 1
    %p90 = scmp.eq.s32.totalorder %s10, 1
    %p91 = scmp.ne.s32.totalorder %s86, %s88
    %p92 = scmp.eq.s32.totalorder %s10, 0
    %p93 = por %p91, %p92
    %p94 = scmp.ne.s32.totalorder %s86, %s88
    %p95 = scmp.eq.s32.totalorder %s15, 1
    %p96 = por %p94, %p95
    %p97 = scmp.ne.s32.totalorder %s88, %s89
    %p98 = scmp.eq.s32.totalorder %s15, 0
    %p99 = por %p97, %p98
    %p100 = scmp.ne.s32.totalorder %s88, %s89
    %p101 = scmp.eq.s32.totalorder %s16, 1
    %p102 = por %p100, %p101
    %p104 = scmp.ne.s32.totalorder %s89, %s103
    %p105 = scmp.eq.s32.totalorder %s16, 0
    %p106 = por %p104, %p105
    %s107 = ssub.s32 %s10, %s17
    %p108 = scmp.eq.s32.totalorder %s107, 0
    %s110 = sadd.s32 %s109, 1
    %s111 = scalar_select %p108, %s109, %s110
    %p114 = pneg %p108
    %p115 = scmp.eq.s32.totalorder %s10, 1
    %p116 = por %p114, %p115
    %p117 = scmp.ne.s32.totalorder %s109, %s112
    %p118 = scmp.eq.s32.totalorder %s10, 0
    %p119 = por %p117, %p118
    %p120 = scmp.ne.s32.totalorder %s109, %s112
    %p121 = scmp.eq.s32.totalorder %s15, 1
    %p122 = por %p120, %p121
    %p123 = scmp.ne.s32.totalorder %s112, %s113
    %p124 = scmp.eq.s32.totalorder %s15, 0
    %p125 = por %p123, %p124
    %p126 = scmp.ne.s32.totalorder %s112, %s113
    %p127 = scmp.eq.s32.totalorder %s16, 1
    %p128 = por %p126, %p127
    %p130 = scmp.ne.s32.totalorder %s113, %s129
    %p131 = scmp.eq.s32.totalorder %s16, 0
    %p132 = por %p130, %p131
    %p133 = scmp.le.s32.totalorder 1, %s10
    %p134 = scmp.lt.s32.totalorder %s10, 3
    %p135 = pnand %p133, %p134
    %p136 = pneg %p135
    // Predicated region
    $region9: #{tpu_custom_call.1} parent=5 // pred_check
      _
    $region10: #{tpu_custom_call.1} parent=5 // pred_check_branch
      %138 = sbr.rel (%p135) target = $region12
    $region11: #{tpu_custom_call.1} parent=5 // pred_region
      %s139 = ssub.s32 %s10, 1
      // Predicated region
      $region13: #{tpu_custom_call.1} parent=11 // pred_check
        %p140 = pneg %p57
      $region14: #{tpu_custom_call.1} parent=11 // pred_check_branch
        %142 = sbr.rel (%p140) target = $region16
      $region15: #{tpu_custom_call.1} parent=11 // pred_region
        _
      $region16: #{tpu_custom_call.1} parent=11 // pred_fallthru
        _
      // Predicated region
      $region17: #{tpu_custom_call.1} parent=11 // pred_check
        %p143 = pneg %p78
      $region18: #{tpu_custom_call.1} parent=11 // pred_check_branch
        %145 = sbr.rel (%p143) target = $region20
      $region19: #{tpu_custom_call.1} parent=11 // pred_region
        _
      $region20: #{tpu_custom_call.1} parent=11 // pred_fallthru
        _
      // Predicated region
      $region21: #{tpu_custom_call.1} parent=11 // pred_check
        %p146 = pneg %p99
      $region22: #{tpu_custom_call.1} parent=11 // pred_check_branch
        %148 = sbr.rel (%p146) target = $region24
      $region23: #{tpu_custom_call.1} parent=11 // pred_region
        _
      $region24: #{tpu_custom_call.1} parent=11 // pred_fallthru
        _
    $region12: #{tpu_custom_call.1} parent=5 // pred_fallthru
      _
    %p149 = scmp.lt.s32.totalorder %s10, 2
    // Predicated region
    $region25: #{tpu_custom_call.1} parent=5 // pred_check
      %p150 = pneg %p149
    $region26: #{tpu_custom_call.1} parent=5 // pred_check_branch
      %152 = sbr.rel (%p150) target = $region28
    $region27: #{tpu_custom_call.1} parent=5 // pred_region
      // Predicated region
      $region29: #{tpu_custom_call.1} parent=27 // pred_check
        %p153 = pneg %p30
      $region30: #{tpu_custom_call.1} parent=27 // pred_check_branch
        %155 = sbr.rel (%p153) target = $region32
      $region31: #{tpu_custom_call.1} parent=27 // pred_region
        %s156 = smul.u32 32, %s10
        %p157 = scmp.lt.s32.totalorder %s156, 63
        %s158 = scalar_select %p157, %s156, 63
        %s159 = smul.addr %s158, 8
        %s160 = scalar_lea.vmem %s0, %s159
        %s161 = smul.u32 32, %s10
      $region32: #{tpu_custom_call.1} parent=27 // pred_fallthru
        _
    $region28: #{tpu_custom_call.1} parent=5 // pred_fallthru
      _
    %p162 = scmp.le.s32.totalorder 1, %s10
    %p163 = scmp.lt.s32.totalorder %s10, 3
    %p164 = pnand %p162, %p163
    %p165 = pneg %p164
    // Predicated region
    $region33: #{tpu_custom_call.1} parent=5 // pred_check
      _
    $region34: #{tpu_custom_call.1} parent=5 // pred_check_branch
      %167 = sbr.rel (%p164) target = $region36
    $region35: #{tpu_custom_call.1} parent=5 // pred_region
      %s168 = ssub.s32 %s10, 1
      %s169 = smul.u32 32, %s15
      %p170 = scmp.lt.s32.totalorder %s169, 63
      %s171 = scalar_select %p170, %s169, 63
      %s172 = smul.addr %s171, 8
      %s173 = scalar_lea.vmem %s0, %s172
      %p174 = pneg %p36
      %p175 = pneg %p33
      %p176 = pneg %p57
      %p177 = pneg %p54
      %p178 = pneg %p78
      %p179 = pneg %p75
      %p180 = pneg %p99
      %p181 = pneg %p96
      %p182 = pneg %p125
      %p183 = pneg %p122
      %s184 = smul.u32 32, %s15
      %p185 = scmp.lt.s32.totalorder %s184, 63
      %s186 = scalar_select %p185, %s184, 63
      %s187 = smul.addr %s186, 8
      %s188 = scalar_lea.vmem %s4, %s187
      %s189 = smul.u32 32, %s15
      %p190 = scmp.lt.s32.totalorder %s189, 63
      %s191 = scalar_select %p190, %s189, 63
      %s192 = smul.addr %s191, 8
      %s193 = scalar_lea.vmem %s0, %s192
      %s194 = smul.u32 32, %s15
      %s195 = smul.u32 32, %s15
      %p196 = scmp.lt.s32.totalorder %s195, 63
      %s197 = scalar_select %p196, %s195, 63
      %s198 = smul.addr %s197, 8
      %s199 = scalar_lea.vmem %s4, %s198
      %s200 = smul.u32 32, %s15
      %v201 = vld [vmem:[%s193] sm:$0xff]
      %v202 = vld [vmem:[%s193 + $0x8] sm:$0xff]
      %v203 = vld [vmem:[%s193 + $0x10] sm:$0xff]
      %v204 = vld [vmem:[%s193 + $0x18] sm:$0xff]
      %v205 = vld [vmem:[%s193 + $0x20] sm:$0xff]
      %v206 = vld [vmem:[%s193 + $0x28] sm:$0xff]
      %v207 = vld [vmem:[%s193 + $0x30] sm:$0xff]
      %v208 = vld [vmem:[%s193 + $0x38] sm:$0xff]
      %v209 = vld [vmem:[%s193 + $0x40] sm:$0xff]
      %v210 = vld [vmem:[%s193 + $0x48] sm:$0xff]
      %v211 = vld [vmem:[%s193 + $0x50] sm:$0xff]
      %v212 = vld [vmem:[%s193 + $0x58] sm:$0xff]
      %v213 = vld [vmem:[%s193 + $0x60] sm:$0xff]
      %v214 = vld [vmem:[%s193 + $0x68] sm:$0xff]
      %v215 = vld [vmem:[%s193 + $0x70] sm:$0xff]
      %v216 = vld [vmem:[%s193 + $0x78] sm:$0xff]
      %v217 = vld [vmem:[%s193 + $0x80] sm:$0xff]
      %v218 = vld [vmem:[%s193 + $0x88] sm:$0xff]
      %v219 = vld [vmem:[%s193 + $0x90] sm:$0xff]
      %v220 = vld [vmem:[%s193 + $0x98] sm:$0xff]
      %v221 = vld [vmem:[%s193 + $0xa0] sm:$0xff]
      %v222 = vld [vmem:[%s193 + $0xa8] sm:$0xff]
      %v223 = vld [vmem:[%s193 + $0xb0] sm:$0xff]
      %v224 = vld [vmem:[%s193 + $0xb8] sm:$0xff]
      %v225 = vld [vmem:[%s193 + $0xc0] sm:$0xff]
      %v226 = vld [vmem:[%s193 + $0xc8] sm:$0xff]
      %v227 = vld [vmem:[%s193 + $0xd0] sm:$0xff]
      %v228 = vld [vmem:[%s193 + $0xd8] sm:$0xff]
      %v229 = vld [vmem:[%s193 + $0xe0] sm:$0xff]
      %v230 = vld [vmem:[%s193 + $0xe8] sm:$0xff]
      %v231 = vld [vmem:[%s193 + $0xf0] sm:$0xff]
      %v232 = vld [vmem:[%s193 + $0xf8] sm:$0xff]
      %v233 = vld [vmem:[%s1] sm:$0xff]
      %v234 = vld [vmem:[%s1 + $0x8] sm:$0xff]
      %v235 = vld [vmem:[%s1 + $0x10] sm:$0xff]
      %v236 = vld [vmem:[%s1 + $0x18] sm:$0xff]
      %v237 = vld [vmem:[%s2] sm:$0x1]
      %v239 = vlaneseq
      %v240 = vshrl.u32 %v239, 7
      %v241 = vsub.s32 0, %v240
      %v242 = vrot.slane %v237, %v241
      %vm244 = vcmask 261120
      %v246 = vsel %vm244, %v201, 0
      %v249 = vsel %vm244, %v202, 0
      %v252 = vsel %vm244, %v203, 0
      %v255 = vsel %vm244, %v204, 0
      %v258 = vsel %vm244, %v205, 0
      %v261 = vsel %vm244, %v206, 0
      %v264 = vsel %vm244, %v207, 0
      %v267 = vsel %vm244, %v208, 0
      %v270 = vsel %vm244, %v209, 0
      %v273 = vsel %vm244, %v210, 0
      %v276 = vsel %vm244, %v211, 0
      %v279 = vsel %vm244, %v212, 0
      %v282 = vsel %vm244, %v213, 0
      %v285 = vsel %vm244, %v214, 0
      %v288 = vsel %vm244, %v215, 0
      %v291 = vsel %vm244, %v216, 0
      %v294 = vsel %vm244, %v217, 0
      %v297 = vsel %vm244, %v218, 0
      %v300 = vsel %vm244, %v219, 0
      %v303 = vsel %vm244, %v220, 0
      %v306 = vsel %vm244, %v221, 0
      %v309 = vsel %vm244, %v222, 0
      %v312 = vsel %vm244, %v223, 0
      %v315 = vsel %vm244, %v224, 0
      %v318 = vsel %vm244, %v225, 0
      %v321 = vsel %vm244, %v226, 0
      %v324 = vsel %vm244, %v227, 0
      %v327 = vsel %vm244, %v228, 0
      %v330 = vsel %vm244, %v229, 0
      %v333 = vsel %vm244, %v230, 0
      %v336 = vsel %vm244, %v231, 0
      %v339 = vsel %vm244, %v232, 0
      %341 = vmatprep.subr.mxu0 0.0
      %342 = vmatpush1.msra.mxu0 %v233
      %343 = vmatprep.subr.mxu0 0.0
      %344 = vmatpush1.msra.mxu0 %v234
      %345 = vmatprep.subr.mxu0 0.0
      %346 = vmatpush1.msra.mxu0 %v235
      %347 = vmatprep.subr.mxu0 0.0
      %348 = vmatpush1.msra.mxu0 %v236
      %349 = vmatprep.subr.mxu0 0.0
      %350 = vmatpush1.msra.mxu0 0.0
      %351 = vmatprep.subr.mxu0 0.0
      %352 = vmatpush1.msra.mxu0 0.0
      %353 = vmatprep.subr.mxu0 0.0
      %354 = vmatpush1.msra.mxu0 0.0
      %355 = vmatprep.subr.mxu0 0.0
      %356 = vmatpush1.msra.mxu0 0.0
      %357 = vmatprep.subr.mxu0 0.0
      %358 = vmatpush1.msra.mxu0 0.0
      %359 = vmatprep.subr.mxu0 0.0
      %360 = vmatpush1.msra.mxu0 0.0
      %361 = vmatprep.subr.mxu0 0.0
      %362 = vmatpush1.msra.mxu0 0.0
      %363 = vmatprep.subr.mxu0 0.0
      %364 = vmatpush1.msra.mxu0 0.0
      %365 = vmatprep.subr.mxu0 0.0
      %366 = vmatpush1.msra.mxu0 0.0
      %367 = vmatprep.subr.mxu0 0.0
      %368 = vmatpush1.msra.mxu0 0.0
      %369 = vmatprep.subr.mxu0 0.0
      %370 = vmatpush1.msra.mxu0 0.0
      %371 = vmatprep.subr.mxu0 0.0
      %372 = vmatpush1.msra.mxu0 0.0
      %373 = vmatprep.subr.mxu0 0.0
      %374 = vmatpush1.msra.mxu0 0.0
      %375 = vmatprep.subr.mxu0 0.0
      %376 = vmatpush1.msra.mxu0 0.0
      %377 = vmatprep.subr.mxu0 0.0
      %378 = vmatpush1.msra.mxu0 0.0
      %379 = vmatprep.subr.mxu0 0.0
      %380 = vmatpush1.msra.mxu0 0.0
      %381 = vmatprep.subr.mxu0 0.0
      %382 = vmatpush1.msra.mxu0 0.0
      %383 = vmatprep.subr.mxu0 0.0
      %384 = vmatpush1.msra.mxu0 0.0
      %385 = vmatprep.subr.mxu0 0.0
      %386 = vmatpush1.msra.mxu0 0.0
      %387 = vmatprep.subr.mxu0 0.0
      %388 = vmatpush1.msra.mxu0 0.0
      %389 = vmatprep.subr.mxu0 0.0
      %390 = vmatpush1.msra.mxu0 0.0
      %391 = vmatprep.subr.mxu0 0.0
      %392 = vmatpush1.msra.mxu0 0.0
      %393 = vmatprep.subr.mxu0 0.0
      %394 = vmatpush1.msra.mxu0 0.0
      %395 = vmatprep.subr.mxu0 0.0
      %396 = vmatpush1.msra.mxu0 0.0
      %397 = vmatprep.subr.mxu0 0.0
      %398 = vmatpush1.msra.mxu0 0.0
      %399 = vmatprep.subr.mxu0 0.0
      %400 = vmatpush1.msra.mxu0 0.0
      %401 = vmatprep.subr.mxu0 0.0
      %402 = vmatpush1.msra.mxu0 0.0
      %403 = vmatprep.subr.mxu0 0.0
      %404 = vmatpush1.msra.mxu0 0.0
      %405 = vmatprep.mubr.f32.mxu0 0.0
      %406 = vmatmul.mubr.f32.gmra.mrb[0].mxu0 %v246
      %v407 = vpop.f32.mrb[0].mxu0
      %v408 = vadd.f32 %v242, %v407
      %v409 = vpop.f32.mrb[0].mxu0
      %410 = vmatprep.mubr.f32.mxu0 0.0
      %411 = vmatmul.mubr.f32.gmra.mrb[0].mxu0 %v249
      %v412 = vpop.f32.mrb[0].mxu0
      %v413 = vadd.f32 %v242, %v412
      %v414 = vpop.f32.mrb[0].mxu0
      %415 = vmatprep.mubr.f32.mxu0 0.0
      %416 = vmatmul.mubr.f32.gmra.mrb[0].mxu0 %v252
      %v417 = vpop.f32.mrb[0].mxu0
      %v418 = vadd.f32 %v242, %v417
      %v419 = vpop.f32.mrb[0].mxu0
      %420 = vmatprep.mubr.f32.mxu0 0.0
      %421 = vmatmul.mubr.f32.gmra.mrb[0].mxu0 %v255
      %v422 = vpop.f32.mrb[0].mxu0
      %v423 = vadd.f32 %v242, %v422
      %v424 = vpop.f32.mrb[0].mxu0
      %425 = vmatprep.mubr.f32.mxu0 0.0
      %426 = vmatmul.mubr.f32.gmra.mrb[0].mxu0 %v258
      %v427 = vpop.f32.mrb[0].mxu0
      %v428 = vadd.f32 %v242, %v427
      %v429 = vpop.f32.mrb[0].mxu0
      %430 = vmatprep.mubr.f32.mxu0 0.0
      %431 = vmatmul.mubr.f32.gmra.mrb[0].mxu0 %v261
      %v432 = vpop.f32.mrb[0].mxu0
      %v433 = vadd.f32 %v242, %v432
      %v434 = vpop.f32.mrb[0].mxu0
      %435 = vmatprep.mubr.f32.mxu0 0.0
      %436 = vmatmul.mubr.f32.gmra.mrb[0].mxu0 %v264
      %v437 = vpop.f32.mrb[0].mxu0
      %v438 = vadd.f32 %v242, %v437
      %v439 = vpop.f32.mrb[0].mxu0
      %440 = vmatprep.mubr.f32.mxu0 0.0
      %441 = vmatmul.mubr.f32.gmra.mrb[0].mxu0 %v267
      %v442 = vpop.f32.mrb[0].mxu0
      %v443 = vadd.f32 %v242, %v442
      %v444 = vpop.f32.mrb[0].mxu0
      %445 = vmatprep.mubr.f32.mxu0 0.0
      %446 = vmatmul.mubr.f32.gmra.mrb[0].mxu0 %v270
      %v447 = vpop.f32.mrb[0].mxu0
      %v448 = vadd.f32 %v242, %v447
      %v449 = vpop.f32.mrb[0].mxu0
      %450 = vmatprep.mubr.f32.mxu0 0.0
      %451 = vmatmul.mubr.f32.gmra.mrb[0].mxu0 %v273
      %v452 = vpop.f32.mrb[0].mxu0
      %v453 = vadd.f32 %v242, %v452
      %v454 = vpop.f32.mrb[0].mxu0
      %455 = vmatprep.mubr.f32.mxu0 0.0
      %456 = vmatmul.mubr.f32.gmra.mrb[0].mxu0 %v276
      %v457 = vpop.f32.mrb[0].mxu0
      %v458 = vadd.f32 %v242, %v457
      %v459 = vpop.f32.mrb[0].mxu0
      %460 = vmatprep.mubr.f32.mxu0 0.0
      %461 = vmatmul.mubr.f32.gmra.mrb[0].mxu0 %v279
      %v462 = vpop.f32.mrb[0].mxu0
      %v463 = vadd.f32 %v242, %v462
      %v464 = vpop.f32.mrb[0].mxu0
      %465 = vmatprep.mubr.f32.mxu0 0.0
      %466 = vmatmul.mubr.f32.gmra.mrb[0].mxu0 %v282
      %v467 = vpop.f32.mrb[0].mxu0
      %v468 = vadd.f32 %v242, %v467
      %v469 = vpop.f32.mrb[0].mxu0
      %470 = vmatprep.mubr.f32.mxu0 0.0
      %471 = vmatmul.mubr.f32.gmra.mrb[0].mxu0 %v285
      %v472 = vpop.f32.mrb[0].mxu0
      %v473 = vadd.f32 %v242, %v472
      %v474 = vpop.f32.mrb[0].mxu0
      %475 = vmatprep.mubr.f32.mxu0 0.0
      %476 = vmatmul.mubr.f32.gmra.mrb[0].mxu0 %v288
      %v477 = vpop.f32.mrb[0].mxu0
      %v478 = vadd.f32 %v242, %v477
      %v479 = vpop.f32.mrb[0].mxu0
      %480 = vmatprep.mubr.f32.mxu0 0.0
      %481 = vmatmul.mubr.f32.gmra.mrb[0].mxu0 %v291
      %v482 = vpop.f32.mrb[0].mxu0
      %v483 = vadd.f32 %v242, %v482
      %v484 = vpop.f32.mrb[0].mxu0
      %485 = vmatprep.mubr.f32.mxu0 0.0
      %486 = vmatmul.mubr.f32.gmra.mrb[0].mxu0 %v294
      %v487 = vpop.f32.mrb[0].mxu0
      %v488 = vadd.f32 %v242, %v487
      %v489 = vpop.f32.mrb[0].mxu0
      %490 = vmatprep.mubr.f32.mxu0 0.0
      %491 = vmatmul.mubr.f32.gmra.mrb[0].mxu0 %v297
      %v492 = vpop.f32.mrb[0].mxu0
      %v493 = vadd.f32 %v242, %v492
      %v494 = vpop.f32.mrb[0].mxu0
      %495 = vmatprep.mubr.f32.mxu0 0.0
      %496 = vmatmul.mubr.f32.gmra.mrb[0].mxu0 %v300
      %v497 = vpop.f32.mrb[0].mxu0
      %v498 = vadd.f32 %v242, %v497
      %v499 = vpop.f32.mrb[0].mxu0
      %500 = vmatprep.mubr.f32.mxu0 0.0
      %501 = vmatmul.mubr.f32.gmra.mrb[0].mxu0 %v303
      %v502 = vpop.f32.mrb[0].mxu0
      %v503 = vadd.f32 %v242, %v502
      %v504 = vpop.f32.mrb[0].mxu0
      %505 = vmatprep.mubr.f32.mxu0 0.0
      %506 = vmatmul.mubr.f32.gmra.mrb[0].mxu0 %v306
      %v507 = vpop.f32.mrb[0].mxu0
      %v508 = vadd.f32 %v242, %v507
      %v509 = vpop.f32.mrb[0].mxu0
      %510 = vmatprep.mubr.f32.mxu0 0.0
      %511 = vmatmul.mubr.f32.gmra.mrb[0].mxu0 %v309
      %v512 = vpop.f32.mrb[0].mxu0
      %v513 = vadd.f32 %v242, %v512
      %v514 = vpop.f32.mrb[0].mxu0
      %515 = vmatprep.mubr.f32.mxu0 0.0
      %516 = vmatmul.mubr.f32.gmra.mrb[0].mxu0 %v312
      %v517 = vpop.f32.mrb[0].mxu0
      %v518 = vadd.f32 %v242, %v517
      %v519 = vpop.f32.mrb[0].mxu0
      %520 = vmatprep.mubr.f32.mxu0 0.0
      %521 = vmatmul.mubr.f32.gmra.mrb[0].mxu0 %v315
      %v522 = vpop.f32.mrb[0].mxu0
      %v523 = vadd.f32 %v242, %v522
      %v524 = vpop.f32.mrb[0].mxu0
      %525 = vmatprep.mubr.f32.mxu0 0.0
      %526 = vmatmul.mubr.f32.gmra.mrb[0].mxu0 %v318
      %v527 = vpop.f32.mrb[0].mxu0
      %v528 = vadd.f32 %v242, %v527
      %v529 = vpop.f32.mrb[0].mxu0
      %530 = vmatprep.mubr.f32.mxu0 0.0
      %531 = vmatmul.mubr.f32.gmra.mrb[0].mxu0 %v321
      %v532 = vpop.f32.mrb[0].mxu0
      %v533 = vadd.f32 %v242, %v532
      %v534 = vpop.f32.mrb[0].mxu0
      %535 = vmatprep.mubr.f32.mxu0 0.0
      %536 = vmatmul.mubr.f32.gmra.mrb[0].mxu0 %v324
      %v537 = vpop.f32.mrb[0].mxu0
      %v538 = vadd.f32 %v242, %v537
      %v539 = vpop.f32.mrb[0].mxu0
      %540 = vmatprep.mubr.f32.mxu0 0.0
      %541 = vmatmul.mubr.f32.gmra.mrb[0].mxu0 %v327
      %v542 = vpop.f32.mrb[0].mxu0
      %v543 = vadd.f32 %v242, %v542
      %v544 = vpop.f32.mrb[0].mxu0
      %545 = vmatprep.mubr.f32.mxu0 0.0
      %546 = vmatmul.mubr.f32.gmra.mrb[0].mxu0 %v330
      %v547 = vpop.f32.mrb[0].mxu0
      %v548 = vadd.f32 %v242, %v547
      %v549 = vpop.f32.mrb[0].mxu0
      %550 = vmatprep.mubr.f32.mxu0 0.0
      %551 = vmatmul.mubr.f32.gmra.mrb[0].mxu0 %v333
      %v552 = vpop.f32.mrb[0].mxu0
      %v553 = vadd.f32 %v242, %v552
      %v554 = vpop.f32.mrb[0].mxu0
      %555 = vmatprep.mubr.f32.mxu0 0.0
      %556 = vmatmul.mubr.f32.gmra.mrb[0].mxu0 %v336
      %v557 = vpop.f32.mrb[0].mxu0
      %v558 = vadd.f32 %v242, %v557
      %v559 = vpop.f32.mrb[0].mxu0
      %560 = vmatprep.mubr.f32.mxu0 0.0
      %561 = vmatmul.mubr.f32.gmra.mrb[0].mxu0 %v339
      %v562 = vpop.f32.mrb[0].mxu0
      %v563 = vadd.f32 %v242, %v562
      %v564 = vpop.f32.mrb[0].mxu0
      %565 = vdwg.mxu0
      %v566 = vmul.f32 %v408, %v408
      %v567 = vmul.f32 %v413, %v413
      %v568 = vmul.f32 %v418, %v418
      %v569 = vmul.f32 %v423, %v423
      %v570 = vmul.f32 %v428, %v428
      %v571 = vmul.f32 %v433, %v433
      %v572 = vmul.f32 %v438, %v438
      %v573 = vmul.f32 %v443, %v443
      %v574 = vmul.f32 %v448, %v448
      %v575 = vmul.f32 %v453, %v453
      %v576 = vmul.f32 %v458, %v458
      %v577 = vmul.f32 %v463, %v463
      %v578 = vmul.f32 %v468, %v468
      %v579 = vmul.f32 %v473, %v473
      %v580 = vmul.f32 %v478, %v478
      %v581 = vmul.f32 %v483, %v483
      %v582 = vmul.f32 %v488, %v488
      %v583 = vmul.f32 %v493, %v493
      %v584 = vmul.f32 %v498, %v498
      %v585 = vmul.f32 %v503, %v503
      %v586 = vmul.f32 %v508, %v508
      %v587 = vmul.f32 %v513, %v513
      %v588 = vmul.f32 %v518, %v518
      %v589 = vmul.f32 %v523, %v523
      %v590 = vmul.f32 %v528, %v528
      %v591 = vmul.f32 %v533, %v533
      %v592 = vmul.f32 %v538, %v538
      %v593 = vmul.f32 %v543, %v543
      %v594 = vmul.f32 %v548, %v548
      %v595 = vmul.f32 %v553, %v553
      %v596 = vmul.f32 %v558, %v558
      %v597 = vmul.f32 %v563, %v563
      %vm598 = vcmask 130048
      %v599 = vsel %vm598, %v566, 0.0
      %600 = vadd.xlane.f32.xlu0 %v599
      %v601 = vpop.xlane.xlu0 %600
      %v602 = vsel %vm598, %v567, 0.0
      %603 = vadd.xlane.f32.xlu0 %v602
      %v604 = vpop.xlane.xlu0 %603
      %v605 = vsel %vm598, %v568, 0.0
      %606 = vadd.xlane.f32.xlu0 %v605
      %v607 = vpop.xlane.xlu0 %606
      %v608 = vsel %vm598, %v569, 0.0
      %609 = vadd.xlane.f32.xlu0 %v608
      %v610 = vpop.xlane.xlu0 %609
      %v611 = vsel %vm598, %v570, 0.0
      %612 = vadd.xlane.f32.xlu0 %v611
      %v613 = vpop.xlane.xlu0 %612
      %v614 = vsel %vm598, %v571, 0.0
      %615 = vadd.xlane.f32.xlu0 %v614
      %v616 = vpop.xlane.xlu0 %615
      %v617 = vsel %vm598, %v572, 0.0
      %618 = vadd.xlane.f32.xlu0 %v617
      %v619 = vpop.xlane.xlu0 %618
      %v620 = vsel %vm598, %v573, 0.0
      %621 = vadd.xlane.f32.xlu0 %v620
      %v622 = vpop.xlane.xlu0 %621
      %v623 = vsel %vm598, %v574, 0.0
      %624 = vadd.xlane.f32.xlu0 %v623
      %v625 = vpop.xlane.xlu0 %624
      %v626 = vsel %vm598, %v575, 0.0
      %627 = vadd.xlane.f32.xlu0 %v626
      %v628 = vpop.xlane.xlu0 %627
      %v629 = vsel %vm598, %v576, 0.0
      %630 = vadd.xlane.f32.xlu0 %v629
      %v631 = vpop.xlane.xlu0 %630
      %v632 = vsel %vm598, %v577, 0.0
      %633 = vadd.xlane.f32.xlu0 %v632
      %v634 = vpop.xlane.xlu0 %633
      %v635 = vsel %vm598, %v578, 0.0
      %636 = vadd.xlane.f32.xlu0 %v635
      %v637 = vpop.xlane.xlu0 %636
      %v638 = vsel %vm598, %v579, 0.0
      %639 = vadd.xlane.f32.xlu0 %v638
      %v640 = vpop.xlane.xlu0 %639
      %v641 = vsel %vm598, %v580, 0.0
      %642 = vadd.xlane.f32.xlu0 %v641
      %v643 = vpop.xlane.xlu0 %642
      %v644 = vsel %vm598, %v581, 0.0
      %645 = vadd.xlane.f32.xlu0 %v644
      %v646 = vpop.xlane.xlu0 %645
      %v647 = vsel %vm598, %v582, 0.0
      %648 = vadd.xlane.f32.xlu0 %v647
      %v649 = vpop.xlane.xlu0 %648
      %v650 = vsel %vm598, %v583, 0.0
      %651 = vadd.xlane.f32.xlu0 %v650
      %v652 = vpop.xlane.xlu0 %651
      %v653 = vsel %vm598, %v584, 0.0
      %654 = vadd.xlane.f32.xlu0 %v653
      %v655 = vpop.xlane.xlu0 %654
      %v656 = vsel %vm598, %v585, 0.0
      %657 = vadd.xlane.f32.xlu0 %v656
      %v658 = vpop.xlane.xlu0 %657
      %v659 = vsel %vm598, %v586, 0.0
      %660 = vadd.xlane.f32.xlu0 %v659
      %v661 = vpop.xlane.xlu0 %660
      %v662 = vsel %vm598, %v587, 0.0
      %663 = vadd.xlane.f32.xlu0 %v662
      %v664 = vpop.xlane.xlu0 %663
      %v665 = vsel %vm598, %v588, 0.0
      %666 = vadd.xlane.f32.xlu0 %v665
      %v667 = vpop.xlane.xlu0 %666
      %v668 = vsel %vm598, %v589, 0.0
      %669 = vadd.xlane.f32.xlu0 %v668
      %v670 = vpop.xlane.xlu0 %669
      %v671 = vsel %vm598, %v590, 0.0
      %672 = vadd.xlane.f32.xlu0 %v671
      %v673 = vpop.xlane.xlu0 %672
      %v674 = vsel %vm598, %v591, 0.0
      %675 = vadd.xlane.f32.xlu0 %v674
      %v676 = vpop.xlane.xlu0 %675
      %v677 = vsel %vm598, %v592, 0.0
      %678 = vadd.xlane.f32.xlu0 %v677
      %v679 = vpop.xlane.xlu0 %678
      %v680 = vsel %vm598, %v593, 0.0
      %681 = vadd.xlane.f32.xlu0 %v680
      %v682 = vpop.xlane.xlu0 %681
      %v683 = vsel %vm598, %v594, 0.0
      %684 = vadd.xlane.f32.xlu0 %v683
      %v685 = vpop.xlane.xlu0 %684
      %v686 = vsel %vm598, %v595, 0.0
      %687 = vadd.xlane.f32.xlu0 %v686
      %v688 = vpop.xlane.xlu0 %687
      %v689 = vsel %vm598, %v596, 0.0
      %690 = vadd.xlane.f32.xlu0 %v689
      %v691 = vpop.xlane.xlu0 %690
      %v692 = vsel %vm598, %v597, 0.0
      %693 = vadd.xlane.f32.xlu0 %v692
      %v694 = vpop.xlane.xlu0 %693
      %v695 = vmax.f32 %v601, 1e-24
      %v696 = vmax.f32 %v604, 1e-24
      %v697 = vmax.f32 %v607, 1e-24
      %v698 = vmax.f32 %v610, 1e-24
      %v699 = vmax.f32 %v613, 1e-24
      %v700 = vmax.f32 %v616, 1e-24
      %v701 = vmax.f32 %v619, 1e-24
      %v702 = vmax.f32 %v622, 1e-24
      %v703 = vmax.f32 %v625, 1e-24
      %v704 = vmax.f32 %v628, 1e-24
      %v705 = vmax.f32 %v631, 1e-24
      %v706 = vmax.f32 %v634, 1e-24
      %v707 = vmax.f32 %v637, 1e-24
      %v708 = vmax.f32 %v640, 1e-24
      %v709 = vmax.f32 %v643, 1e-24
      %v710 = vmax.f32 %v646, 1e-24
      %v711 = vmax.f32 %v649, 1e-24
      %v712 = vmax.f32 %v652, 1e-24
      %v713 = vmax.f32 %v655, 1e-24
      %v714 = vmax.f32 %v658, 1e-24
      %v715 = vmax.f32 %v661, 1e-24
      %v716 = vmax.f32 %v664, 1e-24
      %v717 = vmax.f32 %v667, 1e-24
      %v718 = vmax.f32 %v670, 1e-24
      %v719 = vmax.f32 %v673, 1e-24
      %v720 = vmax.f32 %v676, 1e-24
      %v721 = vmax.f32 %v679, 1e-24
      %v722 = vmax.f32 %v682, 1e-24
      %v723 = vmax.f32 %v685, 1e-24
      %v724 = vmax.f32 %v688, 1e-24
      %v725 = vmax.f32 %v691, 1e-24
      %v726 = vmax.f32 %v694, 1e-24
      %v727 = vrsqrt.pop %v695
      %v728 = vrsqrt.pop %v696
      %v729 = vrsqrt.pop %v697
      %v730 = vrsqrt.pop %v698
      %v731 = vrsqrt.pop %v699
      %v732 = vrsqrt.pop %v700
      %v733 = vrsqrt.pop %v701
      %v734 = vrsqrt.pop %v702
      %v735 = vrsqrt.pop %v703
      %v736 = vrsqrt.pop %v704
      %v737 = vrsqrt.pop %v705
      %v738 = vrsqrt.pop %v706
      %v739 = vrsqrt.pop %v707
      %v740 = vrsqrt.pop %v708
      %v741 = vrsqrt.pop %v709
      %v742 = vrsqrt.pop %v710
      %v743 = vrsqrt.pop %v711
      %v744 = vrsqrt.pop %v712
      %v745 = vrsqrt.pop %v713
      %v746 = vrsqrt.pop %v714
      %v747 = vrsqrt.pop %v715
      %v748 = vrsqrt.pop %v716
      %v749 = vrsqrt.pop %v717
      %v750 = vrsqrt.pop %v718
      %v751 = vrsqrt.pop %v719
      %v752 = vrsqrt.pop %v720
      %v753 = vrsqrt.pop %v721
      %v754 = vrsqrt.pop %v722
      %v755 = vrsqrt.pop %v723
      %v756 = vrsqrt.pop %v724
      %v757 = vrsqrt.pop %v725
      %v758 = vrsqrt.pop %v726
      %v759 = vmul.f32 %v408, %v727
      %v760 = vmul.f32 %v413, %v728
      %v761 = vmul.f32 %v418, %v729
      %v762 = vmul.f32 %v423, %v730
      %v763 = vmul.f32 %v428, %v731
      %v764 = vmul.f32 %v433, %v732
      %v765 = vmul.f32 %v438, %v733
      %v766 = vmul.f32 %v443, %v734
      %v767 = vmul.f32 %v448, %v735
      %v768 = vmul.f32 %v453, %v736
      %v769 = vmul.f32 %v458, %v737
      %v770 = vmul.f32 %v463, %v738
      %v771 = vmul.f32 %v468, %v739
      %v772 = vmul.f32 %v473, %v740
      %v773 = vmul.f32 %v478, %v741
      %v774 = vmul.f32 %v483, %v742
      %v775 = vmul.f32 %v488, %v743
      %v776 = vmul.f32 %v493, %v744
      %v777 = vmul.f32 %v498, %v745
      %v778 = vmul.f32 %v503, %v746
      %v779 = vmul.f32 %v508, %v747
      %v780 = vmul.f32 %v513, %v748
      %v781 = vmul.f32 %v518, %v749
      %v782 = vmul.f32 %v523, %v750
      %v783 = vmul.f32 %v528, %v751
      %v784 = vmul.f32 %v533, %v752
      %v785 = vmul.f32 %v538, %v753
      %v786 = vmul.f32 %v543, %v754
      %v787 = vmul.f32 %v548, %v755
      %v788 = vmul.f32 %v553, %v756
      %v789 = vmul.f32 %v558, %v757
      %v790 = vmul.f32 %v563, %v758
      %v791 = vld [vmem:[%s3] sm:$0xff]
      %v792 = vld [vmem:[%s3 + $0x8] sm:$0xff]
      %v794 = vsel %vm598, %v759, 0
      %v797 = vsel %vm598, %v760, 0
      %v800 = vsel %vm598, %v761, 0
      %v803 = vsel %vm598, %v762, 0
      %v806 = vsel %vm598, %v763, 0
      %v809 = vsel %vm598, %v764, 0
      %v812 = vsel %vm598, %v765, 0
      %v815 = vsel %vm598, %v766, 0
      %v818 = vsel %vm598, %v767, 0
      %v821 = vsel %vm598, %v768, 0
      %v824 = vsel %vm598, %v769, 0
      %v827 = vsel %vm598, %v770, 0
      %v830 = vsel %vm598, %v771, 0
      %v833 = vsel %vm598, %v772, 0
      %v836 = vsel %vm598, %v773, 0
      %v839 = vsel %vm598, %v774, 0
      %v842 = vsel %vm598, %v775, 0
      %v845 = vsel %vm598, %v776, 0
      %v848 = vsel %vm598, %v777, 0
      %v851 = vsel %vm598, %v778, 0
      %v854 = vsel %vm598, %v779, 0
      %v857 = vsel %vm598, %v780, 0
      %v860 = vsel %vm598, %v781, 0
      %v863 = vsel %vm598, %v782, 0
      %v866 = vsel %vm598, %v783, 0
      %v869 = vsel %vm598, %v784, 0
      %v872 = vsel %vm598, %v785, 0
      %v875 = vsel %vm598, %v786, 0
      %v878 = vsel %vm598, %v787, 0
      %v881 = vsel %vm598, %v788, 0
      %v884 = vsel %vm598, %v789, 0
      %v887 = vsel %vm598, %v790, 0
      %889 = vmatprep.subr.mxu0 0.0
      %890 = vmatpush1.msra.mxu0 %v791
      %891 = vmatprep.subr.mxu0 0.0
      %892 = vmatpush1.msra.mxu0 %v792
      %893 = vmatprep.subr.mxu0 0.0
      %894 = vmatpush1.msra.mxu0 0.0
      %895 = vmatprep.subr.mxu0 0.0
      %896 = vmatpush1.msra.mxu0 0.0
      %897 = vmatprep.subr.mxu0 0.0
      %898 = vmatpush1.msra.mxu0 0.0
      %899 = vmatprep.subr.mxu0 0.0
      %900 = vmatpush1.msra.mxu0 0.0
      %901 = vmatprep.subr.mxu0 0.0
      %902 = vmatpush1.msra.mxu0 0.0
      %903 = vmatprep.subr.mxu0 0.0
      %904 = vmatpush1.msra.mxu0 0.0
      %905 = vmatprep.subr.mxu0 0.0
      %906 = vmatpush1.msra.mxu0 0.0
      %907 = vmatprep.subr.mxu0 0.0
      %908 = vmatpush1.msra.mxu0 0.0
      %909 = vmatprep.subr.mxu0 0.0
      %910 = vmatpush1.msra.mxu0 0.0
      %911 = vmatprep.subr.mxu0 0.0
      %912 = vmatpush1.msra.mxu0 0.0
      %913 = vmatprep.subr.mxu0 0.0
      %914 = vmatpush1.msra.mxu0 0.0
      %915 = vmatprep.subr.mxu0 0.0
      %916 = vmatpush1.msra.mxu0 0.0
      %917 = vmatprep.subr.mxu0 0.0
      %918 = vmatpush1.msra.mxu0 0.0
      %919 = vmatprep.subr.mxu0 0.0
      %920 = vmatpush1.msra.mxu0 0.0
      %921 = vmatprep.subr.mxu0 0.0
      %922 = vmatpush1.msra.mxu0 0.0
      %923 = vmatprep.subr.mxu0 0.0
      %924 = vmatpush1.msra.mxu0 0.0
      %925 = vmatprep.subr.mxu0 0.0
      %926 = vmatpush1.msra.mxu0 0.0
      %927 = vmatprep.subr.mxu0 0.0
      %928 = vmatpush1.msra.mxu0 0.0
      %929 = vmatprep.subr.mxu0 0.0
      %930 = vmatpush1.msra.mxu0 0.0
      %931 = vmatprep.subr.mxu0 0.0
      %932 = vmatpush1.msra.mxu0 0.0
      %933 = vmatprep.subr.mxu0 0.0
      %934 = vmatpush1.msra.mxu0 0.0
      %935 = vmatprep.subr.mxu0 0.0
      %936 = vmatpush1.msra.mxu0 0.0
      %937 = vmatprep.subr.mxu0 0.0
      %938 = vmatpush1.msra.mxu0 0.0
      %939 = vmatprep.subr.mxu0 0.0
      %940 = vmatpush1.msra.mxu0 0.0
      %941 = vmatprep.subr.mxu0 0.0
      %942 = vmatpush1.msra.mxu0 0.0
      %943 = vmatprep.subr.mxu0 0.0
      %944 = vmatpush1.msra.mxu0 0.0
      %945 = vmatprep.subr.mxu0 0.0
      %946 = vmatpush1.msra.mxu0 0.0
      %947 = vmatprep.subr.mxu0 0.0
      %948 = vmatpush1.msra.mxu0 0.0
      %949 = vmatprep.subr.mxu0 0.0
      %950 = vmatpush1.msra.mxu0 0.0
      %951 = vmatprep.subr.mxu0 0.0
      %952 = vmatpush1.msra.mxu0 0.0
      %953 = vmatprep.mubr.f32.mxu0 0.0
      %954 = vmatmul.mubr.f32.gmra.mrb[0].mxu0 %v794
      %v955 = vpop.f32.mrb[0].mxu0
      %v956 = vadd.f32 0.0, %v955
      %v957 = vpop.f32.mrb[0].mxu0
      %958 = vmatprep.mubr.f32.mxu0 0.0
      %959 = vmatmul.mubr.f32.gmra.mrb[0].mxu0 %v797
      %v960 = vpop.f32.mrb[0].mxu0
      %v961 = vadd.f32 0.0, %v960
      %v962 = vpop.f32.mrb[0].mxu0
      %963 = vmatprep.mubr.f32.mxu0 0.0
      %964 = vmatmul.mubr.f32.gmra.mrb[0].mxu0 %v800
      %v965 = vpop.f32.mrb[0].mxu0
      %v966 = vadd.f32 0.0, %v965
      %v967 = vpop.f32.mrb[0].mxu0
      %968 = vmatprep.mubr.f32.mxu0 0.0
      %969 = vmatmul.mubr.f32.gmra.mrb[0].mxu0 %v803
      %v970 = vpop.f32.mrb[0].mxu0
      %v971 = vadd.f32 0.0, %v970
      %v972 = vpop.f32.mrb[0].mxu0
      %973 = vmatprep.mubr.f32.mxu0 0.0
      %974 = vmatmul.mubr.f32.gmra.mrb[0].mxu0 %v806
      %v975 = vpop.f32.mrb[0].mxu0
      %v976 = vadd.f32 0.0, %v975
      %v977 = vpop.f32.mrb[0].mxu0
      %978 = vmatprep.mubr.f32.mxu0 0.0
      %979 = vmatmul.mubr.f32.gmra.mrb[0].mxu0 %v809
      %v980 = vpop.f32.mrb[0].mxu0
      %v981 = vadd.f32 0.0, %v980
      %v982 = vpop.f32.mrb[0].mxu0
      %983 = vmatprep.mubr.f32.mxu0 0.0
      %984 = vmatmul.mubr.f32.gmra.mrb[0].mxu0 %v812
      %v985 = vpop.f32.mrb[0].mxu0
      %v986 = vadd.f32 0.0, %v985
      %v987 = vpop.f32.mrb[0].mxu0
      %988 = vmatprep.mubr.f32.mxu0 0.0
      %989 = vmatmul.mubr.f32.gmra.mrb[0].mxu0 %v815
      %v990 = vpop.f32.mrb[0].mxu0
      %v991 = vadd.f32 0.0, %v990
      %v992 = vpop.f32.mrb[0].mxu0
      %993 = vmatprep.mubr.f32.mxu0 0.0
      %994 = vmatmul.mubr.f32.gmra.mrb[0].mxu0 %v818
      %v995 = vpop.f32.mrb[0].mxu0
      %v996 = vadd.f32 0.0, %v995
      %v997 = vpop.f32.mrb[0].mxu0
      %998 = vmatprep.mubr.f32.mxu0 0.0
      %999 = vmatmul.mubr.f32.gmra.mrb[0].mxu0 %v821
      %v1000 = vpop.f32.mrb[0].mxu0
      %v1001 = vadd.f32 0.0, %v1000
      %v1002 = vpop.f32.mrb[0].mxu0
      %1003 = vmatprep.mubr.f32.mxu0 0.0
      %1004 = vmatmul.mubr.f32.gmra.mrb[0].mxu0 %v824
      %v1005 = vpop.f32.mrb[0].mxu0
      %v1006 = vadd.f32 0.0, %v1005
      %v1007 = vpop.f32.mrb[0].mxu0
      %1008 = vmatprep.mubr.f32.mxu0 0.0
      %1009 = vmatmul.mubr.f32.gmra.mrb[0].mxu0 %v827
      %v1010 = vpop.f32.mrb[0].mxu0
      %v1011 = vadd.f32 0.0, %v1010
      %v1012 = vpop.f32.mrb[0].mxu0
      %1013 = vmatprep.mubr.f32.mxu0 0.0
      %1014 = vmatmul.mubr.f32.gmra.mrb[0].mxu0 %v830
      %v1015 = vpop.f32.mrb[0].mxu0
      %v1016 = vadd.f32 0.0, %v1015
      %v1017 = vpop.f32.mrb[0].mxu0
      %1018 = vmatprep.mubr.f32.mxu0 0.0
      %1019 = vmatmul.mubr.f32.gmra.mrb[0].mxu0 %v833
      %v1020 = vpop.f32.mrb[0].mxu0
      %v1021 = vadd.f32 0.0, %v1020
      %v1022 = vpop.f32.mrb[0].mxu0
      %1023 = vmatprep.mubr.f32.mxu0 0.0
      %1024 = vmatmul.mubr.f32.gmra.mrb[0].mxu0 %v836
      %v1025 = vpop.f32.mrb[0].mxu0
      %v1026 = vadd.f32 0.0, %v1025
      %v1027 = vpop.f32.mrb[0].mxu0
      %1028 = vmatprep.mubr.f32.mxu0 0.0
      %1029 = vmatmul.mubr.f32.gmra.mrb[0].mxu0 %v839
      %v1030 = vpop.f32.mrb[0].mxu0
      %v1031 = vadd.f32 0.0, %v1030
      %v1032 = vpop.f32.mrb[0].mxu0
      %1033 = vmatprep.mubr.f32.mxu0 0.0
      %1034 = vmatmul.mubr.f32.gmra.mrb[0].mxu0 %v842
      %v1035 = vpop.f32.mrb[0].mxu0
      %v1036 = vadd.f32 0.0, %v1035
      %v1037 = vpop.f32.mrb[0].mxu0
      %1038 = vmatprep.mubr.f32.mxu0 0.0
      %1039 = vmatmul.mubr.f32.gmra.mrb[0].mxu0 %v845
      %v1040 = vpop.f32.mrb[0].mxu0
      %v1041 = vadd.f32 0.0, %v1040
      %v1042 = vpop.f32.mrb[0].mxu0
      %1043 = vmatprep.mubr.f32.mxu0 0.0
      %1044 = vmatmul.mubr.f32.gmra.mrb[0].mxu0 %v848
      %v1045 = vpop.f32.mrb[0].mxu0
      %v1046 = vadd.f32 0.0, %v1045
      %v1047 = vpop.f32.mrb[0].mxu0
      %1048 = vmatprep.mubr.f32.mxu0 0.0
      %1049 = vmatmul.mubr.f32.gmra.mrb[0].mxu0 %v851
      %v1050 = vpop.f32.mrb[0].mxu0
      %v1051 = vadd.f32 0.0, %v1050
      %v1052 = vpop.f32.mrb[0].mxu0
      %1053 = vmatprep.mubr.f32.mxu0 0.0
      %1054 = vmatmul.mubr.f32.gmra.mrb[0].mxu0 %v854
      %v1055 = vpop.f32.mrb[0].mxu0
      %v1056 = vadd.f32 0.0, %v1055
      %v1057 = vpop.f32.mrb[0].mxu0
      %1058 = vmatprep.mubr.f32.mxu0 0.0
      %1059 = vmatmul.mubr.f32.gmra.mrb[0].mxu0 %v857
      %v1060 = vpop.f32.mrb[0].mxu0
      %v1061 = vadd.f32 0.0, %v1060
      %v1062 = vpop.f32.mrb[0].mxu0
      %1063 = vmatprep.mubr.f32.mxu0 0.0
      %1064 = vmatmul.mubr.f32.gmra.mrb[0].mxu0 %v860
      %v1065 = vpop.f32.mrb[0].mxu0
      %v1066 = vadd.f32 0.0, %v1065
      %v1067 = vpop.f32.mrb[0].mxu0
      %1068 = vmatprep.mubr.f32.mxu0 0.0
      %1069 = vmatmul.mubr.f32.gmra.mrb[0].mxu0 %v863
      %v1070 = vpop.f32.mrb[0].mxu0
      %v1071 = vadd.f32 0.0, %v1070
      %v1072 = vpop.f32.mrb[0].mxu0
      %1073 = vmatprep.mubr.f32.mxu0 0.0
      %1074 = vmatmul.mubr.f32.gmra.mrb[0].mxu0 %v866
      %v1075 = vpop.f32.mrb[0].mxu0
      %v1076 = vadd.f32 0.0, %v1075
      %v1077 = vpop.f32.mrb[0].mxu0
      %1078 = vmatprep.mubr.f32.mxu0 0.0
      %1079 = vmatmul.mubr.f32.gmra.mrb[0].mxu0 %v869
      %v1080 = vpop.f32.mrb[0].mxu0
      %v1081 = vadd.f32 0.0, %v1080
      %v1082 = vpop.f32.mrb[0].mxu0
      %1083 = vmatprep.mubr.f32.mxu0 0.0
      %1084 = vmatmul.mubr.f32.gmra.mrb[0].mxu0 %v872
      %v1085 = vpop.f32.mrb[0].mxu0
      %v1086 = vadd.f32 0.0, %v1085
      %v1087 = vpop.f32.mrb[0].mxu0
      %1088 = vmatprep.mubr.f32.mxu0 0.0
      %1089 = vmatmul.mubr.f32.gmra.mrb[0].mxu0 %v875
      %v1090 = vpop.f32.mrb[0].mxu0
      %v1091 = vadd.f32 0.0, %v1090
      %v1092 = vpop.f32.mrb[0].mxu0
      %1093 = vmatprep.mubr.f32.mxu0 0.0
      %1094 = vmatmul.mubr.f32.gmra.mrb[0].mxu0 %v878
      %v1095 = vpop.f32.mrb[0].mxu0
      %v1096 = vadd.f32 0.0, %v1095
      %v1097 = vpop.f32.mrb[0].mxu0
      %1098 = vmatprep.mubr.f32.mxu0 0.0
      %1099 = vmatmul.mubr.f32.gmra.mrb[0].mxu0 %v881
      %v1100 = vpop.f32.mrb[0].mxu0
      %v1101 = vadd.f32 0.0, %v1100
      %v1102 = vpop.f32.mrb[0].mxu0
      %1103 = vmatprep.mubr.f32.mxu0 0.0
      %1104 = vmatmul.mubr.f32.gmra.mrb[0].mxu0 %v884
      %v1105 = vpop.f32.mrb[0].mxu0
      %v1106 = vadd.f32 0.0, %v1105
      %v1107 = vpop.f32.mrb[0].mxu0
      %1108 = vmatprep.mubr.f32.mxu0 0.0
      %1109 = vmatmul.mubr.f32.gmra.mrb[0].mxu0 %v887
      %v1110 = vpop.f32.mrb[0].mxu0
      %v1111 = vadd.f32 0.0, %v1110
      %v1112 = vpop.f32.mrb[0].mxu0
      %1113 = vdwg.mxu0
      %vm1114 = vcmask 64512
      %1115 = vst.msk [vmem:[%s199] sm:$0xff] %vm1114, %v956
      %1116 = vst.msk [vmem:[%s199 + $0x8] sm:$0xff] %vm1114, %v961
      %1117 = vst.msk [vmem:[%s199 + $0x10] sm:$0xff] %vm1114, %v966
      %1118 = vst.msk [vmem:[%s199 + $0x18] sm:$0xff] %vm1114, %v971
      %1119 = vst.msk [vmem:[%s199 + $0x20] sm:$0xff] %vm1114, %v976
      %1120 = vst.msk [vmem:[%s199 + $0x28] sm:$0xff] %vm1114, %v981
      %1121 = vst.msk [vmem:[%s199 + $0x30] sm:$0xff] %vm1114, %v986
      %1122 = vst.msk [vmem:[%s199 + $0x38] sm:$0xff] %vm1114, %v991
      %1123 = vst.msk [vmem:[%s199 + $0x40] sm:$0xff] %vm1114, %v996
      %1124 = vst.msk [vmem:[%s199 + $0x48] sm:$0xff] %vm1114, %v1001
      %1125 = vst.msk [vmem:[%s199 + $0x50] sm:$0xff] %vm1114, %v1006
      %1126 = vst.msk [vmem:[%s199 + $0x58] sm:$0xff] %vm1114, %v1011
      %1127 = vst.msk [vmem:[%s199 + $0x60] sm:$0xff] %vm1114, %v1016
      %1128 = vst.msk [vmem:[%s199 + $0x68] sm:$0xff] %vm1114, %v1021
      %1129 = vst.msk [vmem:[%s199 + $0x70] sm:$0xff] %vm1114, %v1026
      %1130 = vst.msk [vmem:[%s199 + $0x78] sm:$0xff] %vm1114, %v1031
      %1131 = vst.msk [vmem:[%s199 + $0x80] sm:$0xff] %vm1114, %v1036
      %1132 = vst.msk [vmem:[%s199 + $0x88] sm:$0xff] %vm1114, %v1041
      %1133 = vst.msk [vmem:[%s199 + $0x90] sm:$0xff] %vm1114, %v1046
      %1134 = vst.msk [vmem:[%s199 + $0x98] sm:$0xff] %vm1114, %v1051
      %1135 = vst.msk [vmem:[%s199 + $0xa0] sm:$0xff] %vm1114, %v1056
      %1136 = vst.msk [vmem:[%s199 + $0xa8] sm:$0xff] %vm1114, %v1061
      %1137 = vst.msk [vmem:[%s199 + $0xb0] sm:$0xff] %vm1114, %v1066
      %1138 = vst.msk [vmem:[%s199 + $0xb8] sm:$0xff] %vm1114, %v1071
      %1139 = vst.msk [vmem:[%s199 + $0xc0] sm:$0xff] %vm1114, %v1076
      %1140 = vst.msk [vmem:[%s199 + $0xc8] sm:$0xff] %vm1114, %v1081
      %1141 = vst.msk [vmem:[%s199 + $0xd0] sm:$0xff] %vm1114, %v1086
      %1142 = vst.msk [vmem:[%s199 + $0xd8] sm:$0xff] %vm1114, %v1091
      %1143 = vst.msk [vmem:[%s199 + $0xe0] sm:$0xff] %vm1114, %v1096
      %1144 = vst.msk [vmem:[%s199 + $0xe8] sm:$0xff] %vm1114, %v1101
      %1145 = vst.msk [vmem:[%s199 + $0xf0] sm:$0xff] %vm1114, %v1106
      %1146 = vst.msk [vmem:[%s199 + $0xf8] sm:$0xff] %vm1114, %v1111
      %s1147 = smul.u32 32, %s15
      %p1148 = scmp.lt.s32.totalorder %s1147, 63
      %s1149 = scalar_select %p1148, %s1147, 63
      %s1150 = smul.addr %s1149, 8
      %s1151 = scalar_lea.vmem %s4, %s1150
      // Predicated region
      $region37: #{tpu_custom_call.1} parent=35 // pred_check
        %p1152 = pneg %p122
      $region38: #{tpu_custom_call.1} parent=35 // pred_check_branch
        %1154 = sbr.rel (%p1152) target = $region40
      $region39: #{tpu_custom_call.1} parent=35 // pred_region
        %s1155 = smul.u32 32, %s15
      $region40: #{tpu_custom_call.1} parent=35 // pred_fallthru
        _
    $region36: #{tpu_custom_call.1} parent=5 // pred_fallthru
      _
    %p1156 = scmp.le.s32.totalorder 2, %s10
    // Predicated region
    $region41: #{tpu_custom_call.1} parent=5 // pred_check
      %p1157 = pneg %p1156
    $region42: #{tpu_custom_call.1} parent=5 // pred_check_branch
      %1159 = sbr.rel (%p1157) target = $region44
    $region43: #{tpu_custom_call.1} parent=5 // pred_region
      %s1160 = ssub.s32 %s10, 2
      // Predicated region
      $region45: #{tpu_custom_call.1} parent=43 // pred_check
        %p1161 = pneg %p128
      $region46: #{tpu_custom_call.1} parent=43 // pred_check_branch
        %1163 = sbr.rel (%p1161) target = $region48
      $region47: #{tpu_custom_call.1} parent=43 // pred_region
        %s1164 = smul.u32 32, %s16
        %p1165 = scmp.lt.s32.totalorder %s1164, 63
        %s1166 = scalar_select %p1165, %s1164, 63
        %s1167 = smul.addr %s1166, 8
        %s1168 = scalar_lea.vmem %s4, %s1167
      $region48: #{tpu_custom_call.1} parent=43 // pred_fallthru
        _
    $region44: #{tpu_custom_call.1} parent=5 // pred_fallthru
      _
  $region6: #{tpu_custom_call.1} parent=0 // loop_footer
    %s14 = sadd.s32 1, %s10
  $region7: #{tpu_custom_call.1} parent=0 // loop_footer_branch
    %9 = sbr.rel target = $region3
  $region8: #{tpu_custom_call.1} parent=0 // loop_exit
    _

</llo_original>
